<compile_context>
chip_gen: v5e
topology: v5e:2x2
jax: 0.10.0
libtpu: 0.0.40
codegen_flags: <defaults>
</compile_context>

<pallas_src>
import functools

import jax
import jax.numpy as jnp
from jax import lax
from jax.experimental import pallas as pl
from jax.experimental.pallas import tpu as pltpu


def _round_up(x, m):
    return ((x + m - 1) // m) * m


def _block_spec(shape, index_map, buffers=None):
    """BlockSpec with an optional explicit buffer count.

    Falls back to a plain BlockSpec if this JAX build does not expose
    pipeline_mode / pl.Buffered, so the kernel always constructs."""
    if buffers is not None:
        try:
            return pl.BlockSpec(shape, index_map,
                                pipeline_mode=pl.Buffered(buffers))
        except Exception:
            pass
    return pl.BlockSpec(shape, index_map)


def _vmem_capacity_bytes():
    """Per-core VMEM capacity; conservative fallback (v7x = 64 MiB)."""
    try:
        cap = int(getattr(pltpu.get_tpu_info(), "vmem_capacity_bytes", 0))
        if cap > 0:
            return cap
    except Exception:
        pass
    return 64 * 1024 * 1024


def _downsample_kernel(p_ref, w_ref, g_ref, b_ref, o_ref, *,
                       inv_cout, eps, npad):
    # p_ref: (tm, 9C)      bf16 fused im2col patches
    # w_ref: (9C, Cout_p)  bf16 conv weight (out dim zero padded)
    # g_ref: (1, Cout_p)   fp32 LayerNorm gamma (zero padded)
    # b_ref: (1, Cout_p)   fp32 LayerNorm beta  (zero padded)
    # o_ref: (tm, Cout_p)  output tile (input dtype)
    acc = jnp.dot(p_ref[...], w_ref[...], preferred_element_type=jnp.float32)

    # LayerNorm over the real Cout channels. Padded output channels are exact
    # zeros (zero-padded weights), so:
    #   * the mean from the raw sum / Cout is exact,
    #   * each padded channel contributes mean^2 to sum((x - mean)^2); subtract
    #     npad * mean^2 so the variance matches the real-Cout statistics.
    mean = jnp.sum(acc, axis=-1, keepdims=True) * inv_cout
    d = acc - mean
    var = (jnp.sum(d * d, axis=-1, keepdims=True) - npad * (mean * mean)) * inv_cout
    inv = lax.rsqrt(jnp.maximum(var, 0.0) + eps)
    # Padded channels: gamma = beta = 0 -> output 0 there (sliced off in wrapper).
    o_ref[...] = (d * inv * g_ref[...] + b_ref[...]).astype(o_ref.dtype)


@jax.jit
def downsample_layer(x, w_conv, gamma, beta):
    """
    x:      (N, H, W, C)     channels_last input
    w_conv: (2C, C, 3, 3)    PyTorch Conv2d weight (OIHW)
    gamma:  (2C,)            LayerNorm weight
    beta:   (2C,)            LayerNorm bias
    returns (N, Ho, Wo, 2C)  channels_last, same dtype as x
    """
    N, H, W, C = x.shape
    Cout = 2 * C
    Ho = (H - 1) // 2 + 1
    Wo = (W - 1) // 2 + 1
    M = N * Ho * Wo
    K = 9 * C
    Cout_p = _round_up(Cout, 128)          # lane-dense output stores
    out_dtype = x.dtype
    out_bytes = jnp.dtype(out_dtype).itemsize

    # ---- prepass: bf16 cast + pad + stride-2 taps, fused along K = 9C ----
    xb = x.astype(jnp.bfloat16)
    xp = jnp.pad(xb, ((0, 0), (1, 1), (1, 1), (0, 0)))
    taps = [xp[:, kh:kh + 2 * Ho:2, kw:kw + 2 * Wo:2, :]
            for kh in range(3) for kw in range(3)]        # each (N, Ho, Wo, C)
    patches = jnp.concatenate(taps, axis=-1).reshape(M, K)    # (M, 9C) bf16

    # ---- weights / LN params, out-dim zero padded to Cout_p ----
    # (kh, kw, Ci, Co) row-major matches the tap concat order above.
    w_t = jnp.transpose(w_conv, (2, 3, 1, 0)).reshape(K, Cout)
    w_t = jnp.pad(w_t, ((0, 0), (0, Cout_p - Cout))).astype(jnp.bfloat16)
    g2d = jnp.pad(gamma.astype(jnp.float32), (0, Cout_p - Cout)).reshape(1, Cout_p)
    b2d = jnp.pad(beta.astype(jnp.float32), (0, Cout_p - Cout)).reshape(1, Cout_p)

    # ---- tile selection under a per-generation VMEM budget ----
    cap = _vmem_capacity_bytes()
    budget = int(cap * 0.40)                       # pipelined block working set
    vmem_limit = min(int(cap * 0.70), 128 * 1024 * 1024)

    def vmem_need(t):
        return (2 * t * K * 2                      # patches: double-buffered bf16
                + K * Cout_p * 2                   # weights: single buffer
                + 2 * 2 * Cout_p * 4               # gamma / beta
                + 2 * t * Cout_p * out_bytes)      # output: double-buffered

    tm = 1024
    while tm > 8 and vmem_need(tm) > budget:
        tm //= 2
    # At least 2 grid steps when possible (engages both v7x TensorCores).
    while tm > 8 and pl.cdiv(M, tm) < 2:
        tm //= 2
    # Prefer an exact divisor of M (skips row padding and the post-kernel slice
    # copy) if one exists within 4x of the budget-optimal tile.
    t = tm
    while t >= max(8, tm // 4):
        if M % t == 0:
            tm = t
            break
        t //= 2
    tm = max(8, min(tm, _round_up(M, 8)))

    Mp = _round_up(M, tm)
    if Mp != M:
        patches = jnp.pad(patches, ((0, Mp - M), (0, 0)))

    kernel = functools.partial(_downsample_kernel,
                               inv_cout=1.0 / float(Cout),
                               eps=1e-6,
                               npad=float(Cout_p - Cout))

    cost = pl.CostEstimate(
        flops=2 * Mp * K * Cout_p + 10 * Mp * Cout_p,
        transcendentals=Mp,
        bytes_accessed=(Mp * K * 2 + K * Cout_p * 2 + 2 * Cout_p * 4
                        + Mp * Cout_p * out_bytes))

    out = pl.pallas_call(
        kernel,
        out_shape=jax.ShapeDtypeStruct((Mp, Cout_p), out_dtype),
        grid_spec=pltpu.PrefetchScalarGridSpec(
            num_scalar_prefetch=0,
            grid=(Mp // tm,),
            in_specs=[
                _block_spec((tm, K), lambda i: (i, 0)),                 # streamed
                _block_spec((K, Cout_p), lambda i: (0, 0), buffers=1),  # resident
                _block_spec((1, Cout_p), lambda i: (0, 0), buffers=1),
                _block_spec((1, Cout_p), lambda i: (0, 0), buffers=1),
            ],
            out_specs=pl.BlockSpec((tm, Cout_p), lambda i: (i, 0)),
        ),
        compiler_params=pltpu.CompilerParams(
            dimension_semantics=("parallel",),
            vmem_limit_bytes=vmem_limit),
        cost_estimate=cost,
    )(patches, w_t, g2d, b2d)

    if Mp != M or Cout_p != Cout:
        out = out[:M, :Cout]
    return out.reshape(N, Ho, Wo, Cout)


def _reference(x, w_conv, gamma, beta):
    """Pure-JAX reference mirroring the PyTorch forward pass.

    Operands are rounded to bf16 first so the comparison isolates kernel
    correctness from the (intentional) bf16-MXU precision tradeoff."""
    xb = x.astype(jnp.bfloat16).astype(jnp.float32)
    wb = w_conv.astype(jnp.bfloat16).astype(jnp.float32)
    y = lax.conv_general_dilated(
        jnp.transpose(xb, (0, 3, 1, 2)), wb,
        window_strides=(2, 2), padding=((1, 1), (1, 1)),
        dimension_numbers=("NCHW", "OIHW", "NCHW"))
    y = jnp.transpose(y, (0, 2, 3, 1))                     # channels_last
    mean = jnp.mean(y, axis=-1, keepdims=True)
    var = jnp.mean((y - mean) ** 2, axis=-1, keepdims=True)
    return (y - mean) * lax.rsqrt(var + 1e-6) * gamma + beta


if __name__ == "__main__":
    key = jax.random.PRNGKey(0)
    k_x, k_w, k_g, k_b = jax.random.split(key, 4)

    N, H, W, C = 2, 16, 16, 4
    x = jax.random.normal(k_x, (N, H, W, C), dtype=jnp.float32)
    w_conv = jax.random.normal(k_w, (2 * C, C, 3, 3), dtype=jnp.float32) * 0.1
    gamma = 1.0 + 0.1 * jax.random.normal(k_g, (2 * C,), dtype=jnp.float32)
    beta = 0.1 * jax.random.normal(k_b, (2 * C,), dtype=jnp.float32)

    out = jax.block_until_ready(downsample_layer(x, w_conv, gamma, beta))
    ref = _reference(x, w_conv, gamma, beta)

    assert out.shape == (N, (H - 1) // 2 + 1, (W - 1) // 2 + 1, 2 * C)
    err = float(jnp.max(jnp.abs(out - ref)))
    assert jnp.allclose(out, ref, atol=2e-2, rtol=2e-2), err

    print("KERNEL_OK")
</pallas_src>

<mosaic_0001>
module attributes {stable_mosaic.version = 11 : i64} {
  func.func @_downsample_kernel(%arg0: i32, %arg1: memref<64x36xbf16, #tpu.memory_space<vmem>>, %arg2: memref<36x128xbf16, #tpu.memory_space<vmem>>, %arg3: memref<1x128xf32, #tpu.memory_space<vmem>>, %arg4: memref<1x128xf32, #tpu.memory_space<vmem>>, %arg5: memref<64x128xf32, #tpu.memory_space<vmem>>) attributes {dimension_semantics = [#tpu.dimension_semantics<parallel>], iteration_bounds = array<i64: 2>, scalar_prefetch = 0 : i64, scratch_operands = 0 : i64, tpu.core_type = #tpu.core_type<tc>, window_params = [{transform_indices = @transform_0, window_bounds = array<i64: 64, 36>}, {pipeline_mode = #tpu.pipeline_mode<synchronous>, transform_indices = @transform_1, window_bounds = array<i64: 36, 128>}, {pipeline_mode = #tpu.pipeline_mode<synchronous>, transform_indices = @transform_2, window_bounds = array<i64: 1, 128>}, {pipeline_mode = #tpu.pipeline_mode<synchronous>, transform_indices = @transform_3, window_bounds = array<i64: 1, 128>}, {transform_indices = @transform_4, window_bounds = array<i64: 64, 128>}]} {
    %c0 = arith.constant 0 : index
    %c0_0 = arith.constant 0 : index
    %0 = vector.load %arg1[%c0, %c0_0] : memref<64x36xbf16, #tpu.memory_space<vmem>>, vector<64x36xbf16>
    %c0_1 = arith.constant 0 : index
    %c0_2 = arith.constant 0 : index
    %1 = vector.load %arg2[%c0_1, %c0_2] : memref<36x128xbf16, #tpu.memory_space<vmem>>, vector<36x128xbf16>
    %cst = arith.constant dense<0.000000e+00> : vector<64x128xf32>
    %2 = tpu.matmul %0, %1, %cst {dimension_numbers = #tpu.dot_dimension_numbers<[1], [0], [0], [1], [0, 0, 1, 1], [], []>} : vector<64x36xbf16>, vector<36x128xbf16>, vector<64x128xf32> -> vector<64x128xf32>
    %cst_3 = arith.constant dense<0.000000e+00> : vector<64xf32>
    %3 = vector.multi_reduction <add>, %2, %cst_3 [1] : vector<64x128xf32> to vector<64xf32>
    %4 = vector.shape_cast %3 : vector<64xf32> to vector<64x1xf32>
    %cst_4 = arith.constant 1.250000e-01 : f32
    %5 = vector.broadcast %cst_4 : f32 to vector<64x1xf32>
    %6 = arith.mulf %4, %5 : vector<64x1xf32>
    %7 = vector.broadcast %6 : vector<64x1xf32> to vector<64x128xf32>
    %8 = arith.subf %2, %7 : vector<64x128xf32>
    %9 = arith.mulf %8, %8 : vector<64x128xf32>
    %cst_5 = arith.constant dense<0.000000e+00> : vector<64xf32>
    %10 = vector.multi_reduction <add>, %9, %cst_5 [1] : vector<64x128xf32> to vector<64xf32>
    %11 = vector.shape_cast %10 : vector<64xf32> to vector<64x1xf32>
    %12 = arith.mulf %6, %6 : vector<64x1xf32>
    %cst_6 = arith.constant 1.200000e+02 : f32
    %13 = vector.broadcast %cst_6 : f32 to vector<64x1xf32>
    %14 = arith.mulf %13, %12 : vector<64x1xf32>
    %15 = arith.subf %11, %14 : vector<64x1xf32>
    %cst_7 = arith.constant 1.250000e-01 : f32
    %16 = vector.broadcast %cst_7 : f32 to vector<64x1xf32>
    %17 = arith.mulf %15, %16 : vector<64x1xf32>
    %cst_8 = arith.constant 0.000000e+00 : f32
    %18 = vector.broadcast %cst_8 : f32 to vector<64x1xf32>
    %19 = arith.maximumf %17, %18 : vector<64x1xf32>
    %cst_9 = arith.constant 9.99999997E-7 : f32
    %20 = vector.broadcast %cst_9 : f32 to vector<64x1xf32>
    %21 = arith.addf %19, %20 : vector<64x1xf32>
    %22 = math.rsqrt %21 : vector<64x1xf32>
    %23 = vector.broadcast %22 : vector<64x1xf32> to vector<64x128xf32>
    %24 = arith.mulf %8, %23 : vector<64x128xf32>
    %c0_10 = arith.constant 0 : index
    %c0_11 = arith.constant 0 : index
    %25 = vector.load %arg3[%c0_10, %c0_11] : memref<1x128xf32, #tpu.memory_space<vmem>>, vector<1x128xf32>
    %26 = vector.broadcast %25 : vector<1x128xf32> to vector<64x128xf32>
    %27 = arith.mulf %24, %26 : vector<64x128xf32>
    %c0_12 = arith.constant 0 : index
    %c0_13 = arith.constant 0 : index
    %28 = vector.load %arg4[%c0_12, %c0_13] : memref<1x128xf32, #tpu.memory_space<vmem>>, vector<1x128xf32>
    %29 = vector.broadcast %28 : vector<1x128xf32> to vector<64x128xf32>
    %30 = arith.addf %27, %29 : vector<64x128xf32>
    %c0_14 = arith.constant 0 : index
    %c0_15 = arith.constant 0 : index
    %31 = vector.load %arg5[%c0_14, %c0_15] : memref<64x128xf32, #tpu.memory_space<vmem>>, vector<64x128xf32>
    tpu.vector_store %arg5[%c0_14, %c0_15], %30 {strides = array<i32>} : memref<64x128xf32, #tpu.memory_space<vmem>>, vector<64x128xf32>,
    return
  }
  func.func @transform_0(%arg0: i32) -> (i32, i32) {
    %c0_i32 = arith.constant 0 : i32
    %c0_i32_0 = arith.constant 0 : i32
    return %arg0, %c0_i32 : i32, i32
  }
  func.func @transform_1(%arg0: i32) -> (i32, i32) {
    %c0_i32 = arith.constant 0 : i32
    %c0_i32_0 = arith.constant 0 : i32
    %c0_i32_1 = arith.constant 0 : i32
    return %c0_i32, %c0_i32_0 : i32, i32
  }
  func.func @transform_2(%arg0: i32) -> (i32, i32) {
    %c0_i32 = arith.constant 0 : i32
    %c0_i32_0 = arith.constant 0 : i32
    %c0_i32_1 = arith.constant 0 : i32
    return %c0_i32, %c0_i32_0 : i32, i32
  }
  func.func @transform_3(%arg0: i32) -> (i32, i32) {
    %c0_i32 = arith.constant 0 : i32
    %c0_i32_0 = arith.constant 0 : i32
    %c0_i32_1 = arith.constant 0 : i32
    return %c0_i32, %c0_i32_0 : i32, i32
  }
  func.func @transform_4(%arg0: i32) -> (i32, i32) {
    %c0_i32 = arith.constant 0 : i32
    %c0_i32_0 = arith.constant 0 : i32
    return %arg0, %c0_i32 : i32, i32
  }
}

</mosaic_0001>

<llo_original>
// kernel: downsample_layer.1
$region0: #{downsample_layer.1}
  #allocation0 [shape = 'u32[]', space=smem, size = 0x4, offset = 0x4, fixed_abs, tag = 'smem constant byte address 0x4 - core index']
  #allocation1 [shape = 'u32[72,128]{1,0:T(1,128)}', space=vmem, size = 0x9000, scoped, tag = 'internal scratch']
  %s0 = inlined_call_operand.vmem [shape: bf16[128,36], index: 0, kind: input, shape index: {}]
  %s1 = inlined_call_operand.vmem [shape: bf16[36,128], index: 1, kind: input, shape index: {}]
  %s2 = inlined_call_operand.vmem [shape: f32[1,128], index: 2, kind: input, shape index: {}]
  %s3 = inlined_call_operand.vmem [shape: f32[1,128], index: 3, kind: input, shape index: {}]
  %s4 = inlined_call_operand.hbm [shape: f32[128,128], index: 4, kind: output, shape index: {}]
  %s5 = sld [smem:[#allocation0]]
  $region49: #{downsample_layer.1} parent=0
    _
  %s7 = ssub.s32 1, %s5
  %s8 = scalar_select 0, %s7, %s5
  $region1: #{downsample_layer.1} parent=0
    #allocation2 [shape = 'u8[65536]{0}', space=vmem, size = 0x10000, scoped, tag = 'output window, operand 0']
    #allocation3 [shape = 's32[2]{0}', space=sflag, size = 0x8, scoped, tag = 'scoped memory for downsample_layer.1']
    %9 = vsyncpa [#allocation3], 0
    %s10 = scalar_lea.sflag [#allocation3], 1
    %11 = vsyncpa %s10, 0
    loop: start=0, step=1, limit=4
    $region2: #{downsample_layer.1} parent=1 // loop_pre_header
      _
    $region3: #{downsample_layer.1} parent=1 // loop_header
      %s13 = sphi 0, %s17
      %p14 = scmp.ge.s32.totalorder %s13, 4
      %s23 = sphi 0, %s25
      %s26 = sphi 0, %s23
      %s27 = sphi 0, %s26
      %s43 = sphi 0, %s27
      %s47 = sphi 0, %s47
      %s49 = sphi 0, %s47
      %s50 = sphi 0, %s49
      %s64 = sphi 0, %s50
      %s68 = sphi 0, %s68
      %s70 = sphi 0, %s68
      %s71 = sphi 0, %s70
      %s85 = sphi 0, %s71
      %s89 = sphi 0, %s89
      %s91 = sphi 0, %s89
      %s92 = sphi 0, %s91
      %s106 = sphi 0, %s92
      %s112 = sphi 0, %s114
      %s115 = sphi 0, %s112
      %s116 = sphi 0, %s115
      %s132 = sphi 0, %s116
    $region4: #{downsample_layer.1} parent=1 // loop_header_branch
      %16 = sbr.rel (%p14) target = $region8
    $region5: #{downsample_layer.1} parent=1 // loop_body
      %s18 = ssub.s32 %s13, 1
      %s19 = ssub.s32 %s13, 2
      %s20 = sadd.s32 %s13, 1
      %s21 = ssub.s32 %s13, %s20
      %p22 = scmp.eq.s32.totalorder %s21, 0
      %s24 = sadd.s32 %s23, 1
      %s25 = scalar_select %p22, %s23, %s24
      %p28 = pneg %p22
      %p29 = scmp.eq.s32.totalorder %s13, 1
      %p30 = por %p28, %p29
      %p31 = scmp.ne.s32.totalorder %s23, %s26
      %p32 = scmp.eq.s32.totalorder %s13, 0
      %p33 = por %p31, %p32
      %p34 = scmp.ne.s32.totalorder %s23, %s26
      %p35 = scmp.eq.s32.totalorder %s18, 1
      %p36 = por %p34, %p35
      %p37 = scmp.ne.s32.totalorder %s26, %s27
      %p38 = scmp.eq.s32.totalorder %s18, 0
      %p39 = por %p37, %p38
      %p40 = scmp.ne.s32.totalorder %s26, %s27
      %p41 = scmp.eq.s32.totalorder %s19, 1
      %p42 = por %p40, %p41
      %p44 = scmp.ne.s32.totalorder %s27, %s43
      %p45 = scmp.eq.s32.totalorder %s19, 0
      %p46 = por %p44, %p45
      %s48 = sadd.s32 %s47, 1
      %p51 = scmp.eq.s32.totalorder %s13, 1
      %p52 = scmp.ne.s32.totalorder %s47, %s49
      %p53 = scmp.eq.s32.totalorder %s13, 0
      %p54 = por %p52, %p53
      %p55 = scmp.ne.s32.totalorder %s47, %s49
      %p56 = scmp.eq.s32.totalorder %s18, 1
      %p57 = por %p55, %p56
      %p58 = scmp.ne.s32.totalorder %s49, %s50
      %p59 = scmp.eq.s32.totalorder %s18, 0
      %p60 = por %p58, %p59
      %p61 = scmp.ne.s32.totalorder %s49, %s50
      %p62 = scmp.eq.s32.totalorder %s19, 1
      %p63 = por %p61, %p62
      %p65 = scmp.ne.s32.totalorder %s50, %s64
      %p66 = scmp.eq.s32.totalorder %s19, 0
      %p67 = por %p65, %p66
      %s69 = sadd.s32 %s68, 1
      %p72 = scmp.eq.s32.totalorder %s13, 1
      %p73 = scmp.ne.s32.totalorder %s68, %s70
      %p74 = scmp.eq.s32.totalorder %s13, 0
      %p75 = por %p73, %p74
      %p76 = scmp.ne.s32.totalorder %s68, %s70
      %p77 = scmp.eq.s32.totalorder %s18, 1
      %p78 = por %p76, %p77
      %p79 = scmp.ne.s32.totalorder %s70, %s71
      %p80 = scmp.eq.s32.totalorder %s18, 0
      %p81 = por %p79, %p80
      %p82 = scmp.ne.s32.totalorder %s70, %s71
      %p83 = scmp.eq.s32.totalorder %s19, 1
      %p84 = por %p82, %p83
      %p86 = scmp.ne.s32.totalorder %s71, %s85
      %p87 = scmp.eq.s32.totalorder %s19, 0
      %p88 = por %p86, %p87
      %s90 = sadd.s32 %s89, 1
      %p93 = scmp.eq.s32.totalorder %s13, 1
      %p94 = scmp.ne.s32.totalorder %s89, %s91
      %p95 = scmp.eq.s32.totalorder %s13, 0
      %p96 = por %p94, %p95
      %p97 = scmp.ne.s32.totalorder %s89, %s91
      %p98 = scmp.eq.s32.totalorder %s18, 1
      %p99 = por %p97, %p98
      %p100 = scmp.ne.s32.totalorder %s91, %s92
      %p101 = scmp.eq.s32.totalorder %s18, 0
      %p102 = por %p100, %p101
      %p103 = scmp.ne.s32.totalorder %s91, %s92
      %p104 = scmp.eq.s32.totalorder %s19, 1
      %p105 = por %p103, %p104
      %p107 = scmp.ne.s32.totalorder %s92, %s106
      %p108 = scmp.eq.s32.totalorder %s19, 0
      %p109 = por %p107, %p108
      %s110 = ssub.s32 %s13, %s20
      %p111 = scmp.eq.s32.totalorder %s110, 0
      %s113 = sadd.s32 %s112, 1
      %s114 = scalar_select %p111, %s112, %s113
      %p117 = pneg %p111
      %p118 = scmp.eq.s32.totalorder %s13, 1
      %p119 = por %p117, %p118
      %p120 = scmp.ne.s32.totalorder %s112, %s115
      %p121 = scmp.eq.s32.totalorder %s13, 0
      %p122 = por %p120, %p121
      %p123 = scmp.ne.s32.totalorder %s112, %s115
      %p124 = scmp.eq.s32.totalorder %s18, 1
      %p125 = por %p123, %p124
      %p126 = scmp.ne.s32.totalorder %s115, %s116
      %p127 = scmp.eq.s32.totalorder %s18, 0
      %p128 = por %p126, %p127
      %p129 = scmp.ne.s32.totalorder %s115, %s116
      %p130 = scmp.eq.s32.totalorder %s19, 1
      %p131 = por %p129, %p130
      %p133 = scmp.ne.s32.totalorder %s116, %s132
      %p134 = scmp.eq.s32.totalorder %s19, 0
      %p135 = por %p133, %p134
      %p136 = scmp.le.s32.totalorder 1, %s13
      %p137 = scmp.lt.s32.totalorder %s13, 3
      %p138 = pnand %p136, %p137
      %p139 = pneg %p138
      // Predicated region
      $region9: #{downsample_layer.1} parent=5 // pred_check
        _
      $region10: #{downsample_layer.1} parent=5 // pred_check_branch
        %141 = sbr.rel (%p138) target = $region12
      $region11: #{downsample_layer.1} parent=5 // pred_region
        %s142 = ssub.s32 %s13, 1
        // Predicated region
        $region13: #{downsample_layer.1} parent=11 // pred_check
          %p143 = pneg %p60
        $region14: #{downsample_layer.1} parent=11 // pred_check_branch
          %145 = sbr.rel (%p143) target = $region16
        $region15: #{downsample_layer.1} parent=11 // pred_region
          _
        $region16: #{downsample_layer.1} parent=11 // pred_fallthru
          _
        // Predicated region
        $region17: #{downsample_layer.1} parent=11 // pred_check
          %p146 = pneg %p81
        $region18: #{downsample_layer.1} parent=11 // pred_check_branch
          %148 = sbr.rel (%p146) target = $region20
        $region19: #{downsample_layer.1} parent=11 // pred_region
          _
        $region20: #{downsample_layer.1} parent=11 // pred_fallthru
          _
        // Predicated region
        $region21: #{downsample_layer.1} parent=11 // pred_check
          %p149 = pneg %p102
        $region22: #{downsample_layer.1} parent=11 // pred_check_branch
          %151 = sbr.rel (%p149) target = $region24
        $region23: #{downsample_layer.1} parent=11 // pred_region
          _
        $region24: #{downsample_layer.1} parent=11 // pred_fallthru
          _
      $region12: #{downsample_layer.1} parent=5 // pred_fallthru
        _
      %p152 = scmp.lt.s32.totalorder %s13, 2
      // Predicated region
      $region25: #{downsample_layer.1} parent=5 // pred_check
        %p153 = pneg %p152
      $region26: #{downsample_layer.1} parent=5 // pred_check_branch
        %155 = sbr.rel (%p153) target = $region28
      $region27: #{downsample_layer.1} parent=5 // pred_region
        // Predicated region
        $region29: #{downsample_layer.1} parent=27 // pred_check
          %p156 = pneg %p33
        $region30: #{downsample_layer.1} parent=27 // pred_check_branch
          %158 = sbr.rel (%p156) target = $region32
        $region31: #{downsample_layer.1} parent=27 // pred_region
          %s159 = smul.u32 8, %s13
          %p160 = scmp.lt.s32.totalorder %s159, 15
          %s161 = scalar_select %p160, %s159, 15
          %s162 = smul.addr %s161, 4
          %s163 = scalar_lea.vmem %s0, %s162
          %s164 = smul.u32 8, %s13
        $region32: #{downsample_layer.1} parent=27 // pred_fallthru
          _
      $region28: #{downsample_layer.1} parent=5 // pred_fallthru
        _
      %p165 = scmp.le.s32.totalorder 1, %s13
      %p166 = scmp.lt.s32.totalorder %s13, 3
      %p167 = pnand %p165, %p166
      %p168 = pneg %p167
      // Predicated region
      $region33: #{downsample_layer.1} parent=5 // pred_check
        _
      $region34: #{downsample_layer.1} parent=5 // pred_check_branch
        %170 = sbr.rel (%p167) target = $region36
      $region35: #{downsample_layer.1} parent=5 // pred_region
        %s171 = ssub.s32 %s13, 1
        %s172 = smul.u32 8, %s18
        %p173 = scmp.lt.s32.totalorder %s172, 15
        %s174 = scalar_select %p173, %s172, 15
        %s175 = smul.addr %s174, 4
        %s176 = scalar_lea.vmem %s0, %s175
        %p177 = pneg %p39
        %p178 = pneg %p36
        %p179 = pneg %p60
        %p180 = pneg %p57
        %p181 = pneg %p81
        %p182 = pneg %p78
        %p183 = pneg %p102
        %p184 = pneg %p99
        %p185 = pneg %p128
        %p186 = pneg %p125
        %s187 = sand.u32 %s115, 1
        %s188 = scalar_lea.sflag [#allocation3], %s187
        %s189 = sand.u32 %s115, 1
        %s190 = smul.addr %s189, 64
        %s191 = scalar_lea.vmem [#allocation2], %s190
        %s192 = smul.u32 8, %s18
        %p193 = scmp.lt.s32.totalorder %s192, 15
        %s194 = scalar_select %p193, %s192, 15
        %s195 = smul.addr %s194, 4
        %s196 = scalar_lea.vmem %s0, %s195
        %s197 = smul.u32 8, %s18
        %s198 = smul.u32 8, %s18
        %v200 = vld [vmem:[%s196] sm:$0xf]
        %v201 = vld [vmem:[%s196 + $0x4] sm:$0xf]
        %v202 = vld [vmem:[%s196 + $0x8] sm:$0xf]
        %v203 = vld [vmem:[%s196 + $0xc] sm:$0xf]
        %v204 = vld [vmem:[%s196 + $0x10] sm:$0xf]
        %v205 = vld [vmem:[%s196 + $0x14] sm:$0xf]
        %v206 = vld [vmem:[%s196 + $0x18] sm:$0xf]
        %v207 = vld [vmem:[%s196 + $0x1c] sm:$0xf]
        %v208 = vld [vmem:[%s1] sm:$0xf]
        %v209 = vld [vmem:[%s1 + $0x4] sm:$0xf]
        %v210 = vld [vmem:[%s1 + $0x8] sm:$0xf]
        %v211 = vld [vmem:[%s1 + $0xc] sm:$0xf]
        %v212 = vld [vmem:[%s1 + $0x10] sm:$0x3]
        %v221 = vunpack.c.l.b16 %v200
        %v222 = vunpack.c.l.b16 %v201
        %v223 = vunpack.c.l.b16 %v202
        %v224 = vunpack.c.l.b16 %v203
        %v225 = vunpack.c.l.b16 %v204
        %v226 = vunpack.c.l.b16 %v205
        %v227 = vunpack.c.l.b16 %v206
        %v228 = vunpack.c.l.b16 %v207
        %v229 = vpack.c.b16 %v222, %v221
        %v230 = vpack.c.b16 %v224, %v223
        %v231 = vpack.c.b16 %v226, %v225
        %v232 = vpack.c.b16 %v228, %v227
        %v238 = vunpack.c.l.b16 %v208
        %v239 = vunpack.c.l.b16 %v209
        %v240 = vunpack.c.l.b16 %v210
        %v241 = vunpack.c.l.b16 %v211
        %v242 = vunpack.c.l.b16 %v212
        %v243 = vpack.c.b16 %v239, %v238
        %v244 = vpack.c.b16 %v241, %v240
        %v245 = vpack.c.b16 %v242, %v242
        %vm248 = vcmask 293888
        %v250 = vsel %vm248, %v229, 0
        %v253 = vsel %vm248, %v230, 0
        %v256 = vsel %vm248, %v231, 0
        %v259 = vsel %vm248, %v232, 0
        %vm261 = vcmask 1041408
        %v263 = vsel %vm261, %v245, 0
        %265 = vmatpush.bf16.msra.mxu0 0
        %266 = vmatpush.bf16.msra.mxu0 0
        %267 = vmatpush.bf16.msra.mxu0 0
        %268 = vmatpush.bf16.msra.mxu0 0
        %269 = vmatpush.bf16.msra.mxu0 0
        %270 = vmatpush.bf16.msra.mxu0 %v263
        %271 = vmatpush.bf16.msra.mxu0 %v244
        %272 = vmatpush.bf16.msra.mxu0 %v243
        %273 = vmatmul.bf16.gmra.mxu0 %v250
        %v274 = vpop.f32.mrf.mxu0
        %v275 = vadd.f32 0.0, %v274
        %v276 = vpop.f32.mrf.mxu0
        %v277 = vadd.f32 0.0, %v276
        %278 = vmatmul.bf16.gmra.mxu0 %v253
        %v279 = vpop.f32.mrf.mxu0
        %v280 = vadd.f32 0.0, %v279
        %v281 = vpop.f32.mrf.mxu0
        %v282 = vadd.f32 0.0, %v281
        %283 = vmatmul.bf16.gmra.mxu0 %v256
        %v284 = vpop.f32.mrf.mxu0
        %v285 = vadd.f32 0.0, %v284
        %v286 = vpop.f32.mrf.mxu0
        %v287 = vadd.f32 0.0, %v286
        %288 = vmatmul.bf16.gmra.mxu0 %v259
        %v289 = vpop.f32.mrf.mxu0
        %v290 = vadd.f32 0.0, %v289
        %v291 = vpop.f32.mrf.mxu0
        %v292 = vadd.f32 0.0, %v291
        %293 = vdwg.mxu0
        %294 = vadd.xlane.f32.xlu0 %v275
        %v295 = vpop.xlane.xlu0 %294
        %296 = vadd.xlane.f32.xlu0 %v277
        %v297 = vpop.xlane.xlu0 %296
        %298 = vadd.xlane.f32.xlu0 %v280
        %v299 = vpop.xlane.xlu0 %298
        %300 = vadd.xlane.f32.xlu0 %v282
        %v301 = vpop.xlane.xlu0 %300
        %302 = vadd.xlane.f32.xlu0 %v285
        %v303 = vpop.xlane.xlu0 %302
        %304 = vadd.xlane.f32.xlu0 %v287
        %v305 = vpop.xlane.xlu0 %304
        %306 = vadd.xlane.f32.xlu0 %v290
        %v307 = vpop.xlane.xlu0 %306
        %308 = vadd.xlane.f32.xlu0 %v292
        %v309 = vpop.xlane.xlu0 %308
        %v310 = vmul.f32 %v295, 0.125
        %v311 = vmul.f32 %v297, 0.125
        %v312 = vmul.f32 %v299, 0.125
        %v313 = vmul.f32 %v301, 0.125
        %v314 = vmul.f32 %v303, 0.125
        %v315 = vmul.f32 %v305, 0.125
        %v316 = vmul.f32 %v307, 0.125
        %v317 = vmul.f32 %v309, 0.125
        %v318 = vsub.f32 %v275, %v310
        %v319 = vsub.f32 %v277, %v311
        %v320 = vsub.f32 %v280, %v312
        %v321 = vsub.f32 %v282, %v313
        %v322 = vsub.f32 %v285, %v314
        %v323 = vsub.f32 %v287, %v315
        %v324 = vsub.f32 %v290, %v316
        %v325 = vsub.f32 %v292, %v317
        %v326 = vmul.f32 %v318, %v318
        %v327 = vmul.f32 %v319, %v319
        %v328 = vmul.f32 %v320, %v320
        %v329 = vmul.f32 %v321, %v321
        %v330 = vmul.f32 %v322, %v322
        %v331 = vmul.f32 %v323, %v323
        %v332 = vmul.f32 %v324, %v324
        %v333 = vmul.f32 %v325, %v325
        %334 = vadd.xlane.f32.xlu0 %v326
        %v335 = vpop.xlane.xlu0 %334
        %336 = vadd.xlane.f32.xlu0 %v327
        %v337 = vpop.xlane.xlu0 %336
        %338 = vadd.xlane.f32.xlu0 %v328
        %v339 = vpop.xlane.xlu0 %338
        %340 = vadd.xlane.f32.xlu0 %v329
        %v341 = vpop.xlane.xlu0 %340
        %342 = vadd.xlane.f32.xlu0 %v330
        %v343 = vpop.xlane.xlu0 %342
        %344 = vadd.xlane.f32.xlu0 %v331
        %v345 = vpop.xlane.xlu0 %344
        %346 = vadd.xlane.f32.xlu0 %v332
        %v347 = vpop.xlane.xlu0 %346
        %348 = vadd.xlane.f32.xlu0 %v333
        %v349 = vpop.xlane.xlu0 %348
        %v350 = vmul.f32 %v310, %v310
        %v351 = vmul.f32 %v311, %v311
        %v352 = vmul.f32 %v312, %v312
        %v353 = vmul.f32 %v313, %v313
        %v354 = vmul.f32 %v314, %v314
        %v355 = vmul.f32 %v315, %v315
        %v356 = vmul.f32 %v316, %v316
        %v357 = vmul.f32 %v317, %v317
        %v358 = vmul.f32 %v350, 120.0
        %v359 = vmul.f32 %v351, 120.0
        %v360 = vmul.f32 %v352, 120.0
        %v361 = vmul.f32 %v353, 120.0
        %v362 = vmul.f32 %v354, 120.0
        %v363 = vmul.f32 %v355, 120.0
        %v364 = vmul.f32 %v356, 120.0
        %v365 = vmul.f32 %v357, 120.0
        %v366 = vsub.f32 %v335, %v358
        %v367 = vsub.f32 %v337, %v359
        %v368 = vsub.f32 %v339, %v360
        %v369 = vsub.f32 %v341, %v361
        %v370 = vsub.f32 %v343, %v362
        %v371 = vsub.f32 %v345, %v363
        %v372 = vsub.f32 %v347, %v364
        %v373 = vsub.f32 %v349, %v365
        %v374 = vmul.f32 %v366, 0.125
        %v375 = vmul.f32 %v367, 0.125
        %v376 = vmul.f32 %v368, 0.125
        %v377 = vmul.f32 %v369, 0.125
        %v378 = vmul.f32 %v370, 0.125
        %v379 = vmul.f32 %v371, 0.125
        %v380 = vmul.f32 %v372, 0.125
        %v381 = vmul.f32 %v373, 0.125
        %v382 = vmax.f32 %v374, 0.0
        %v383 = vmax.f32 %v375, 0.0
        %v384 = vmax.f32 %v376, 0.0
        %v385 = vmax.f32 %v377, 0.0
        %v386 = vmax.f32 %v378, 0.0
        %v387 = vmax.f32 %v379, 0.0
        %v388 = vmax.f32 %v380, 0.0
        %v389 = vmax.f32 %v381, 0.0
        %v390 = vadd.f32 %v382, 1e-06
        %v391 = vadd.f32 %v383, 1e-06
        %v392 = vadd.f32 %v384, 1e-06
        %v393 = vadd.f32 %v385, 1e-06
        %v394 = vadd.f32 %v386, 1e-06
        %v395 = vadd.f32 %v387, 1e-06
        %v396 = vadd.f32 %v388, 1e-06
        %v397 = vadd.f32 %v389, 1e-06
        %v398 = vrsqrt.pop %v390
        %v399 = vmul.f32 %v398, %v390
        %v400 = vmul.f32 %v399, %v398
        %v401 = vmul.f32 0.5, %v400
        %v402 = vsub.f32 1.5, %v401
        %v403 = vmul.f32 %v398, %v402
        %vm404 = vweird.f32 %v390
        %vm405 = vweird.f32 %v398
        %vm406 = vmor %vm404, %vm405
        %v407 = vsel %vm406, %v398, %v403
        %v408 = vrsqrt.pop %v391
        %v409 = vmul.f32 %v408, %v391
        %v410 = vmul.f32 %v409, %v408
        %v411 = vmul.f32 0.5, %v410
        %v412 = vsub.f32 1.5, %v411
        %v413 = vmul.f32 %v408, %v412
        %vm414 = vweird.f32 %v391
        %vm415 = vweird.f32 %v408
        %vm416 = vmor %vm414, %vm415
        %v417 = vsel %vm416, %v408, %v413
        %v418 = vrsqrt.pop %v392
        %v419 = vmul.f32 %v418, %v392
        %v420 = vmul.f32 %v419, %v418
        %v421 = vmul.f32 0.5, %v420
        %v422 = vsub.f32 1.5, %v421
        %v423 = vmul.f32 %v418, %v422
        %vm424 = vweird.f32 %v392
        %vm425 = vweird.f32 %v418
        %vm426 = vmor %vm424, %vm425
        %v427 = vsel %vm426, %v418, %v423
        %v428 = vrsqrt.pop %v393
        %v429 = vmul.f32 %v428, %v393
        %v430 = vmul.f32 %v429, %v428
        %v431 = vmul.f32 0.5, %v430
        %v432 = vsub.f32 1.5, %v431
        %v433 = vmul.f32 %v428, %v432
        %vm434 = vweird.f32 %v393
        %vm435 = vweird.f32 %v428
        %vm436 = vmor %vm434, %vm435
        %v437 = vsel %vm436, %v428, %v433
        %v438 = vrsqrt.pop %v394
        %v439 = vmul.f32 %v438, %v394
        %v440 = vmul.f32 %v439, %v438
        %v441 = vmul.f32 0.5, %v440
        %v442 = vsub.f32 1.5, %v441
        %v443 = vmul.f32 %v438, %v442
        %vm444 = vweird.f32 %v394
        %vm445 = vweird.f32 %v438
        %vm446 = vmor %vm444, %vm445
        %v447 = vsel %vm446, %v438, %v443
        %v448 = vrsqrt.pop %v395
        %v449 = vmul.f32 %v448, %v395
        %v450 = vmul.f32 %v449, %v448
        %v451 = vmul.f32 0.5, %v450
        %v452 = vsub.f32 1.5, %v451
        %v453 = vmul.f32 %v448, %v452
        %vm454 = vweird.f32 %v395
        %vm455 = vweird.f32 %v448
        %vm456 = vmor %vm454, %vm455
        %v457 = vsel %vm456, %v448, %v453
        %v458 = vrsqrt.pop %v396
        %v459 = vmul.f32 %v458, %v396
        %v460 = vmul.f32 %v459, %v458
        %v461 = vmul.f32 0.5, %v460
        %v462 = vsub.f32 1.5, %v461
        %v463 = vmul.f32 %v458, %v462
        %vm464 = vweird.f32 %v396
        %vm465 = vweird.f32 %v458
        %vm466 = vmor %vm464, %vm465
        %v467 = vsel %vm466, %v458, %v463
        %v468 = vrsqrt.pop %v397
        %v469 = vmul.f32 %v468, %v397
        %v470 = vmul.f32 %v469, %v468
        %v471 = vmul.f32 0.5, %v470
        %v472 = vsub.f32 1.5, %v471
        %v473 = vmul.f32 %v468, %v472
        %vm474 = vweird.f32 %v397
        %vm475 = vweird.f32 %v468
        %vm476 = vmor %vm474, %vm475
        %v477 = vsel %vm476, %v468, %v473
        %v478 = vmul.f32 %v318, %v407
        %v479 = vmul.f32 %v319, %v417
        %v480 = vmul.f32 %v320, %v427
        %v481 = vmul.f32 %v321, %v437
        %v482 = vmul.f32 %v322, %v447
        %v483 = vmul.f32 %v323, %v457
        %v484 = vmul.f32 %v324, %v467
        %v485 = vmul.f32 %v325, %v477
        %v486 = vld [vmem:[%s2] sm:$0x1]
        %v488 = vperm.slane %v486, 0
        %v490 = vmul.f32 %v478, %v488
        %v491 = vmul.f32 %v479, %v488
        %v492 = vmul.f32 %v480, %v488
        %v493 = vmul.f32 %v481, %v488
        %v494 = vmul.f32 %v482, %v488
        %v495 = vmul.f32 %v483, %v488
        %v496 = vmul.f32 %v484, %v488
        %v497 = vmul.f32 %v485, %v488
        %v498 = vld [vmem:[%s3] sm:$0x1]
        %v500 = vperm.slane %v498, 0
        %v502 = vadd.f32 %v490, %v500
        %v503 = vadd.f32 %v491, %v500
        %v504 = vadd.f32 %v492, %v500
        %v505 = vadd.f32 %v493, %v500
        %v506 = vadd.f32 %v494, %v500
        %v507 = vadd.f32 %v495, %v500
        %v508 = vadd.f32 %v496, %v500
        %v509 = vadd.f32 %v497, %v500
        %510 = vst [vmem:[%s191] sm:$0xff] %v502
        %511 = vst [vmem:[%s191 + $0x8] sm:$0xff] %v503
        %512 = vst [vmem:[%s191 + $0x10] sm:$0xff] %v504
        %513 = vst [vmem:[%s191 + $0x18] sm:$0xff] %v505
        %514 = vst [vmem:[%s191 + $0x20] sm:$0xff] %v506
        %515 = vst [vmem:[%s191 + $0x28] sm:$0xff] %v507
        %516 = vst [vmem:[%s191 + $0x30] sm:$0xff] %v508
        %517 = vst [vmem:[%s191 + $0x38] sm:$0xff] %v509
        %s518 = sand.u32 %s115, 1
        %s519 = scalar_lea.sflag [#allocation3], %s518
        %s520 = sand.u32 %s115, 1
        %s521 = smul.addr %s520, 64
        %s522 = scalar_lea.vmem [#allocation2], %s521
        // Predicated region
        $region37: #{downsample_layer.1} parent=35 // pred_check
          %p523 = pneg %p125
        $region38: #{downsample_layer.1} parent=35 // pred_check_branch
          %525 = sbr.rel (%p523) target = $region40
        $region39: #{downsample_layer.1} parent=35 // pred_region
          %s526 = smul.u32 8, %s18
          %528 = vsyncadd %s519, 0
          %s529 = smul.addr %s526, 8
          %s530 = scalar_lea.hbm %s4, %s529
          %s531 = sshll.u32 %s522, 4
          %s532 = int_to_ptr.vmem [resolvable:$true] %s531
          %s533 = sshll.u32 %s530, 4
          %s534 = int_to_ptr.hbm [resolvable:$true] %s533
          %539 = dma.vmem_to_hbm [thread:$0]  %s532, 1024, %s534, %s519, 128, 128, 8
        $region40: #{downsample_layer.1} parent=35 // pred_fallthru
          _
      $region36: #{downsample_layer.1} parent=5 // pred_fallthru
        _
      %p540 = scmp.le.s32.totalorder 2, %s13
      // Predicated region
      $region41: #{downsample_layer.1} parent=5 // pred_check
        %p541 = pneg %p540
      $region42: #{downsample_layer.1} parent=5 // pred_check_branch
        %543 = sbr.rel (%p541) target = $region44
      $region43: #{downsample_layer.1} parent=5 // pred_region
        %s544 = ssub.s32 %s13, 2
        // Predicated region
        $region45: #{downsample_layer.1} parent=43 // pred_check
          %p545 = pneg %p131
        $region46: #{downsample_layer.1} parent=43 // pred_check_branch
          %547 = sbr.rel (%p545) target = $region48
        $region47: #{downsample_layer.1} parent=43 // pred_region
          %s548 = sand.u32 %s116, 1
          %s549 = scalar_lea.sflag [#allocation3], %s548
          %s550 = sand.u32 %s116, 1
          %s551 = smul.addr %s550, 64
          %s552 = scalar_lea.vmem [#allocation2], %s551
          %554 = dma.done %s549, 1024
        $region48: #{downsample_layer.1} parent=43 // pred_fallthru
          _
      $region44: #{downsample_layer.1} parent=5 // pred_fallthru
        _
    $region6: #{downsample_layer.1} parent=1 // loop_footer
      %s17 = sadd.s32 1, %s13
    $region7: #{downsample_layer.1} parent=1 // loop_footer_branch
      %12 = sbr.rel target = $region3
    $region8: #{downsample_layer.1} parent=1 // loop_exit
      _
    %555 = vsyncpa [#allocation3], 1
    %s556 = scalar_lea.sflag [#allocation3], 1
    %557 = vsyncpa %s556, 1

</llo_original>
